<compile_context>
chip_gen: v6e
topology: v6e:2x2x1
jax: 0.10.0
libtpu: 0.0.40
codegen_flags: <defaults>
</compile_context>

<pallas_src>
import jax
import jax.numpy as jnp
from jax.experimental import pallas as pl
from jax.experimental.pallas import tpu as pltpu

INPUT_SIZE = 13
HIDDEN = 100
GPAD = 128                 # per-gate padded lane width
NUM_GATES = 3              # i, g, o (forget gate is dead since c0 == 0)
FC1 = 128
NUM_CLASSES = 8
MAX_TB = 512               # batch tile (rows per grid step)


def _round_up(n, m):
    return ((n + m - 1) // m) * m


def lstm_head_kernel(x_ref, wih_ref, bg_ref, w1_ref, b1_ref, w2_ref, b2_ref, out_ref):
    # x: (TB, 13)
    x = x_ref[...]

    # ---- LSTM cell, single timestep, h0 = c0 = 0 ----
    # gates = x @ W_ih_packed + (b_ih + b_hh)    -> (TB, 3*128), layout [i | g | o]
    gates = jnp.dot(x, wih_ref[...], preferred_element_type=jnp.float32) + bg_ref[...]

    i_gate = jax.nn.sigmoid(gates[:, 0 * GPAD:1 * GPAD])   # 128-aligned slices
    g_gate = jnp.tanh(gates[:, 1 * GPAD:2 * GPAD])
    o_gate = jax.nn.sigmoid(gates[:, 2 * GPAD:3 * GPAD])

    c1 = i_gate * g_gate            # c0 = 0 => f-gate contribution is exactly 0
    h1 = o_gate * jnp.tanh(c1)      # (TB, 128); pad lanes 100..127 are exactly 0

    # ---- fc_1 -> fc_2 (no activation in between, matching the module) ----
    z1 = jnp.dot(h1, w1_ref[...], preferred_element_type=jnp.float32) + b1_ref[...]   # (TB, 128)
    z2 = jnp.dot(z1, w2_ref[...], preferred_element_type=jnp.float32) + b2_ref[...]   # (TB, 8)

    # ---- softmax over classes ----
    z2 = z2 - jnp.max(z2, axis=-1, keepdims=True)
    e = jnp.exp(z2)
    inv = pl.reciprocal(jnp.sum(e, axis=-1, keepdims=True), approx=False)
    out_ref[...] = e * inv


def lstm_forward(x, packed_params):
    """x: (B, 13) or any shape with B*13 elements (matches x.view(B, 1, -1))."""
    B = x.shape[0]
    x = x.reshape(B, INPUT_SIZE).astype(jnp.float32)
    (w_ih_pack, b_gates, w1_pad, b1, w2_t, b2) = packed_params

    # Batch tiling: TB multiple of 8, capped at MAX_TB; pad B up to a multiple of TB.
    tb = min(MAX_TB, _round_up(B, 8))
    b_pad = _round_up(B, tb)
    if b_pad != B:
        x = jnp.pad(x, ((0, b_pad - B), (0, 0)))
    grid = (b_pad // tb,)

    out = pl.pallas_call(
        lstm_head_kernel,
        out_shape=jax.ShapeDtypeStruct((b_pad, NUM_CLASSES), jnp.float32),
        grid_spec=pltpu.PrefetchScalarGridSpec(
            num_scalar_prefetch=0,
            grid=grid,
            in_specs=[
                pl.BlockSpec((tb, INPUT_SIZE), lambda i: (i, 0)),            # x tile
                pl.BlockSpec((INPUT_SIZE, NUM_GATES * GPAD), lambda i: (0, 0)),  # W_ih packed
                pl.BlockSpec((1, NUM_GATES * GPAD), lambda i: (0, 0)),       # b_ih + b_hh
                pl.BlockSpec((GPAD, FC1), lambda i: (0, 0)),                 # W1^T (zero-padded rows)
                pl.BlockSpec((1, FC1), lambda i: (0, 0)),                    # b1
                pl.BlockSpec((FC1, NUM_CLASSES), lambda i: (0, 0)),          # W2^T
                pl.BlockSpec((1, NUM_CLASSES), lambda i: (0, 0)),            # b2
            ],
            out_specs=pl.BlockSpec((tb, NUM_CLASSES), lambda i: (i, 0)),
        ),
        compiler_params=pltpu.CompilerParams(
            dimension_semantics=("parallel",),   # lets v7x's 2 TCs split the batch
        ),
    )(x, w_ih_pack, b_gates, w1_pad, b1, w2_t, b2)
    return out[:B]


# ---------------------------------------------------------------------------
# Parameter construction (PyTorch-layout raw params) + one-time host repacking
# ---------------------------------------------------------------------------

def init_raw_params(key):
    """Deterministic synthetic parameters in native PyTorch layout/scales."""
    ks = jax.random.split(key, 8)
    k_lstm = 1.0 / jnp.sqrt(HIDDEN)
    w_ih = jax.random.uniform(ks[0], (4 * HIDDEN, INPUT_SIZE), jnp.float32, -k_lstm, k_lstm)
    b_ih = jax.random.uniform(ks[1], (4 * HIDDEN,), jnp.float32, -k_lstm, k_lstm)
    b_hh = jax.random.uniform(ks[2], (4 * HIDDEN,), jnp.float32, -k_lstm, k_lstm)
    k1 = 1.0 / jnp.sqrt(HIDDEN)
    w1 = jax.random.uniform(ks[3], (FC1, HIDDEN), jnp.float32, -k1, k1)
    b1 = jax.random.uniform(ks[4], (FC1,), jnp.float32, -k1, k1)
    k2 = 1.0 / jnp.sqrt(FC1)
    w2 = jax.random.uniform(ks[5], (NUM_CLASSES, FC1), jnp.float32, -k2, k2)
    b2 = jax.random.uniform(ks[6], (NUM_CLASSES,), jnp.float32, -k2, k2)
    return (w_ih, b_ih, b_hh, w1, b1, w2, b2)


def pack_params(w_ih, b_ih, b_hh, w1, b1, w2, b2):
    """One-time host-side repack into the kernel's 128-aligned layout.

    PyTorch gate row order in w_ih / biases: i [0:H), f [H:2H), g [2H:3H), o [3H:4H).
    The forget gate is dropped (dead: c0 == 0). Each kept gate is padded to 128 lanes
    with zero weight/bias columns.
    """
    w_ih_t = w_ih.T                       # (13, 4H)
    b_sum = b_ih + b_hh                   # fold the two biases

    def pad_w(g):   # gate index in PyTorch order -> (13, GPAD)
        block = w_ih_t[:, g * HIDDEN:(g + 1) * HIDDEN]
        return jnp.pad(block, ((0, 0), (0, GPAD - HIDDEN)))

    def pad_b(g):   # -> (GPAD,), pad bias = 0 so pad lanes yield h1 == 0
        return jnp.pad(b_sum[g * HIDDEN:(g + 1) * HIDDEN], (0, GPAD - HIDDEN))

    # Packed gate order used by the kernel: [i | g | o]
    w_ih_pack = jnp.concatenate([pad_w(0), pad_w(2), pad_w(3)], axis=1)        # (13, 384)
    b_gates = jnp.concatenate([pad_b(0), pad_b(2), pad_b(3)]).reshape(1, -1)   # (1, 384)

    # fc_1 weight: (FC1, HIDDEN) -> transposed + zero-padded rows 100..127 (required so
    # that nothing from the padded h1 lanes could leak into z1).
    w1_pad = jnp.pad(w1.T, ((0, GPAD - HIDDEN), (0, 0)))                        # (128, 128)

    return (
        w_ih_pack,
        b_gates,
        w1_pad,
        b1.reshape(1, -1),   # (1, 128)
        w2.T,                # (128, 8)
        b2.reshape(1, -1),   # (1, 8)
    )


def reference_forward(x, raw_params):
    """Pure-JAX reference mirroring the PyTorch forward exactly (untouched layout)."""
    (w_ih, b_ih, b_hh, w1, b1, w2, b2) = raw_params
    B = x.shape[0]
    x = x.reshape(B, INPUT_SIZE)
    gates = x @ w_ih.T + b_ih + b_hh
    i = jax.nn.sigmoid(gates[:, 0 * HIDDEN:1 * HIDDEN])
    f = jax.nn.sigmoid(gates[:, 1 * HIDDEN:2 * HIDDEN])
    g = jnp.tanh(gates[:, 2 * HIDDEN:3 * HIDDEN])
    o = jax.nn.sigmoid(gates[:, 3 * HIDDEN:4 * HIDDEN])
    c = f * jnp.zeros_like(g) + i * g          # c0 = 0
    h = o * jnp.tanh(c)
    z = (h @ w1.T + b1) @ w2.T + b2
    return jax.nn.softmax(z, axis=-1)


if __name__ == "__main__":
    key = jax.random.PRNGKey(0)
    k_x, k_p = jax.random.split(key)

    B = 2
    x = jax.random.normal(k_x, (B, INPUT_SIZE), dtype=jnp.float32)
    raw = init_raw_params(k_p)
    packed = pack_params(*raw)

    out = lstm_forward(x, packed)
    out = jax.block_until_ready(out)

    ref = reference_forward(x, raw)
    assert out.shape == (B, NUM_CLASSES)
    assert jnp.allclose(out, ref, atol=1e-5, rtol=1e-5), "mismatch vs JAX reference"
    assert jnp.allclose(jnp.sum(out, axis=-1), 1.0, atol=1e-5), "softmax rows must sum to 1"

    print("KERNEL_OK")
</pallas_src>

<mosaic_0001>
module attributes {stable_mosaic.version = 11 : i64} {
  func.func @lstm_head_kernel(%arg0: i32, %arg1: memref<8x13xf32, #tpu.memory_space<vmem>>, %arg2: memref<13x384xf32, #tpu.memory_space<vmem>>, %arg3: memref<1x384xf32, #tpu.memory_space<vmem>>, %arg4: memref<128x128xf32, #tpu.memory_space<vmem>>, %arg5: memref<1x128xf32, #tpu.memory_space<vmem>>, %arg6: memref<128x8xf32, #tpu.memory_space<vmem>>, %arg7: memref<1x8xf32, #tpu.memory_space<vmem>>, %arg8: memref<8x8xf32, #tpu.memory_space<vmem>>) attributes {dimension_semantics = [#tpu.dimension_semantics<parallel>], iteration_bounds = array<i64: 1>, scalar_prefetch = 0 : i64, scratch_operands = 0 : i64, tpu.core_type = #tpu.core_type<tc>, window_params = [{transform_indices = @transform_0, window_bounds = array<i64: 8, 13>}, {pipeline_mode = #tpu.pipeline_mode<synchronous>, transform_indices = @transform_1, window_bounds = array<i64: 13, 384>}, {pipeline_mode = #tpu.pipeline_mode<synchronous>, transform_indices = @transform_2, window_bounds = array<i64: 1, 384>}, {pipeline_mode = #tpu.pipeline_mode<synchronous>, transform_indices = @transform_3, window_bounds = array<i64: 128, 128>}, {pipeline_mode = #tpu.pipeline_mode<synchronous>, transform_indices = @transform_4, window_bounds = array<i64: 1, 128>}, {pipeline_mode = #tpu.pipeline_mode<synchronous>, transform_indices = @transform_5, window_bounds = array<i64: 128, 8>}, {pipeline_mode = #tpu.pipeline_mode<synchronous>, transform_indices = @transform_6, window_bounds = array<i64: 1, 8>}, {transform_indices = @transform_7, window_bounds = array<i64: 8, 8>}]} {
    %c0 = arith.constant 0 : index
    %c0_0 = arith.constant 0 : index
    %0 = vector.load %arg1[%c0, %c0_0] : memref<8x13xf32, #tpu.memory_space<vmem>>, vector<8x13xf32>
    %c0_1 = arith.constant 0 : index
    %c0_2 = arith.constant 0 : index
    %1 = vector.load %arg2[%c0_1, %c0_2] : memref<13x384xf32, #tpu.memory_space<vmem>>, vector<13x384xf32>
    %cst = arith.constant dense<0.000000e+00> : vector<8x384xf32>
    %2 = tpu.matmul %0, %1, %cst {dimension_numbers = #tpu.dot_dimension_numbers<[1], [0], [0], [1], [0, 0, 1, 1], [], []>} : vector<8x13xf32>, vector<13x384xf32>, vector<8x384xf32> -> vector<8x384xf32>
    %c0_3 = arith.constant 0 : index
    %c0_4 = arith.constant 0 : index
    %3 = vector.load %arg3[%c0_3, %c0_4] : memref<1x384xf32, #tpu.memory_space<vmem>>, vector<1x384xf32>
    %4 = vector.broadcast %3 : vector<1x384xf32> to vector<8x384xf32>
    %5 = arith.addf %2, %4 : vector<8x384xf32>
    %6 = vector.extract_strided_slice %5 {offsets = [0, 0], sizes = [8, 128], strides = [1, 1]} : vector<8x384xf32> to vector<8x128xf32>
    %7 = arith.negf %6 : vector<8x128xf32>
    %8 = math.exp %7 : vector<8x128xf32>
    %cst_5 = arith.constant 1.000000e+00 : f32
    %9 = vector.broadcast %cst_5 : f32 to vector<8x128xf32>
    %10 = arith.addf %9, %8 : vector<8x128xf32>
    %11 = arith.divf %9, %10 : vector<8x128xf32>
    %12 = vector.extract_strided_slice %5 {offsets = [0, 128], sizes = [8, 128], strides = [1, 1]} : vector<8x384xf32> to vector<8x128xf32>
    %13 = math.tanh %12 : vector<8x128xf32>
    %14 = vector.extract_strided_slice %5 {offsets = [0, 256], sizes = [8, 128], strides = [1, 1]} : vector<8x384xf32> to vector<8x128xf32>
    %15 = arith.negf %14 : vector<8x128xf32>
    %16 = math.exp %15 : vector<8x128xf32>
    %cst_6 = arith.constant 1.000000e+00 : f32
    %17 = vector.broadcast %cst_6 : f32 to vector<8x128xf32>
    %18 = arith.addf %17, %16 : vector<8x128xf32>
    %19 = arith.divf %17, %18 : vector<8x128xf32>
    %20 = arith.mulf %11, %13 : vector<8x128xf32>
    %21 = math.tanh %20 : vector<8x128xf32>
    %22 = arith.mulf %19, %21 : vector<8x128xf32>
    %c0_7 = arith.constant 0 : index
    %c0_8 = arith.constant 0 : index
    %23 = vector.load %arg4[%c0_7, %c0_8] : memref<128x128xf32, #tpu.memory_space<vmem>>, vector<128x128xf32>
    %cst_9 = arith.constant dense<0.000000e+00> : vector<8x128xf32>
    %24 = tpu.matmul %22, %23, %cst_9 {dimension_numbers = #tpu.dot_dimension_numbers<[1], [0], [0], [1], [0, 0, 1, 1], [], []>} : vector<8x128xf32>, vector<128x128xf32>, vector<8x128xf32> -> vector<8x128xf32>
    %c0_10 = arith.constant 0 : index
    %c0_11 = arith.constant 0 : index
    %25 = vector.load %arg5[%c0_10, %c0_11] : memref<1x128xf32, #tpu.memory_space<vmem>>, vector<1x128xf32>
    %26 = vector.broadcast %25 : vector<1x128xf32> to vector<8x128xf32>
    %27 = arith.addf %24, %26 : vector<8x128xf32>
    %c0_12 = arith.constant 0 : index
    %c0_13 = arith.constant 0 : index
    %28 = vector.load %arg6[%c0_12, %c0_13] : memref<128x8xf32, #tpu.memory_space<vmem>>, vector<128x8xf32>
    %cst_14 = arith.constant dense<0.000000e+00> : vector<8x8xf32>
    %29 = tpu.matmul %27, %28, %cst_14 {dimension_numbers = #tpu.dot_dimension_numbers<[1], [0], [0], [1], [0, 0, 1, 1], [], []>} : vector<8x128xf32>, vector<128x8xf32>, vector<8x8xf32> -> vector<8x8xf32>
    %c0_15 = arith.constant 0 : index
    %c0_16 = arith.constant 0 : index
    %30 = vector.load %arg7[%c0_15, %c0_16] : memref<1x8xf32, #tpu.memory_space<vmem>>, vector<1x8xf32>
    %31 = vector.broadcast %30 : vector<1x8xf32> to vector<8x8xf32>
    %32 = arith.addf %29, %31 : vector<8x8xf32>
    %cst_17 = arith.constant dense<0xFF800000> : vector<8xf32>
    %33 = vector.multi_reduction <maximumf>, %32, %cst_17 [1] : vector<8x8xf32> to vector<8xf32>
    %34 = vector.shape_cast %33 : vector<8xf32> to vector<8x1xf32>
    %35 = vector.broadcast %34 : vector<8x1xf32> to vector<8x8xf32>
    %36 = arith.subf %32, %35 : vector<8x8xf32>
    %37 = math.exp %36 : vector<8x8xf32>
    %cst_18 = arith.constant dense<0.000000e+00> : vector<8xf32>
    %38 = vector.multi_reduction <add>, %37, %cst_18 [1] : vector<8x8xf32> to vector<8xf32>
    %39 = vector.shape_cast %38 : vector<8xf32> to vector<8x1xf32>
    %40 = tpu.reciprocal %39 : vector<8x1xf32> -> vector<8x1xf32>
    %41 = vector.broadcast %40 : vector<8x1xf32> to vector<8x8xf32>
    %42 = arith.mulf %37, %41 : vector<8x8xf32>
    %c0_19 = arith.constant 0 : index
    %c0_20 = arith.constant 0 : index
    %43 = vector.load %arg8[%c0_19, %c0_20] : memref<8x8xf32, #tpu.memory_space<vmem>>, vector<8x8xf32>
    tpu.vector_store %arg8[%c0_19, %c0_20], %42 {strides = array<i32>} : memref<8x8xf32, #tpu.memory_space<vmem>>, vector<8x8xf32>,
    return
  }
  func.func @transform_0(%arg0: i32) -> (i32, i32) {
    %c0_i32 = arith.constant 0 : i32
    %c0_i32_0 = arith.constant 0 : i32
    return %arg0, %c0_i32 : i32, i32
  }
  func.func @transform_1(%arg0: i32) -> (i32, i32) {
    %c0_i32 = arith.constant 0 : i32
    %c0_i32_0 = arith.constant 0 : i32
    %c0_i32_1 = arith.constant 0 : i32
    return %c0_i32, %c0_i32_0 : i32, i32
  }
  func.func @transform_2(%arg0: i32) -> (i32, i32) {
    %c0_i32 = arith.constant 0 : i32
    %c0_i32_0 = arith.constant 0 : i32
    %c0_i32_1 = arith.constant 0 : i32
    return %c0_i32, %c0_i32_0 : i32, i32
  }
  func.func @transform_3(%arg0: i32) -> (i32, i32) {
    %c0_i32 = arith.constant 0 : i32
    %c0_i32_0 = arith.constant 0 : i32
    %c0_i32_1 = arith.constant 0 : i32
    return %c0_i32, %c0_i32_0 : i32, i32
  }
  func.func @transform_4(%arg0: i32) -> (i32, i32) {
    %c0_i32 = arith.constant 0 : i32
    %c0_i32_0 = arith.constant 0 : i32
    %c0_i32_1 = arith.constant 0 : i32
    return %c0_i32, %c0_i32_0 : i32, i32
  }
  func.func @transform_5(%arg0: i32) -> (i32, i32) {
    %c0_i32 = arith.constant 0 : i32
    %c0_i32_0 = arith.constant 0 : i32
    %c0_i32_1 = arith.constant 0 : i32
    return %c0_i32, %c0_i32_0 : i32, i32
  }
  func.func @transform_6(%arg0: i32) -> (i32, i32) {
    %c0_i32 = arith.constant 0 : i32
    %c0_i32_0 = arith.constant 0 : i32
    %c0_i32_1 = arith.constant 0 : i32
    return %c0_i32, %c0_i32_0 : i32, i32
  }
  func.func @transform_7(%arg0: i32) -> (i32, i32) {
    %c0_i32 = arith.constant 0 : i32
    %c0_i32_0 = arith.constant 0 : i32
    return %arg0, %c0_i32 : i32, i32
  }
}

</mosaic_0001>

<llo_original>
// kernel: tpu_custom_call.1
$region0: #{tpu_custom_call.1}
  #allocation0 [shape = 'u32[]', space=smem, size = 0x4, offset = 0x4, fixed_abs, tag = 'smem constant byte address 0x4 - core index']
  #allocation1 [shape = 'u32[144,128]{1,0:T(1,128)}', space=vmem, size = 0x12000, scoped, tag = 'internal scratch']
  %s0 = inlined_call_operand.vmem [shape: f32[8,13], index: 0, kind: input, shape index: {}]
  %s1 = inlined_call_operand.hbm [shape: f32[13,384], index: 1, kind: input, shape index: {}]
  %s2 = inlined_call_operand.hbm [shape: f32[1,384], index: 2, kind: input, shape index: {}]
  %s3 = inlined_call_operand.vmem [shape: f32[128,128], index: 3, kind: input, shape index: {}]
  %s4 = inlined_call_operand.vmem [shape: f32[1,128], index: 4, kind: input, shape index: {}]
  %s5 = inlined_call_operand.vmem [shape: f32[128,8], index: 5, kind: input, shape index: {}]
  %s6 = inlined_call_operand.vmem [shape: f32[1,8], index: 6, kind: input, shape index: {}]
  %s7 = inlined_call_operand.hbm [shape: f32[8,8], index: 7, kind: output, shape index: {}]
  %s8 = sld [smem:[#allocation0]]
  $region46: #{tpu_custom_call.1} parent=0
    _
  %s10 = ssub.s32 1, %s8
  %s11 = scalar_select 0, %s10, %s8
  $region1: #{tpu_custom_call.1} parent=0
    #allocation2 [shape = 'u8[24576]{0}', space=vmem, size = 0x6000, scoped, tag = 'input window, operand 1, single buffered']
    #allocation3 [shape = 's32[1]{0}', space=sflag, size = 0x4, scoped, tag = 'scoped memory for tpu_custom_call.1']
    #allocation4 [shape = 's32[1]{0}', space=sflag, size = 0x4, scoped, tag = 'scoped memory for tpu_custom_call.1']
    #allocation5 [shape = 'u8[1536]{0}', space=vmem, size = 0x800, scoped, tag = 'input window, operand 2, single buffered']
    #allocation6 [shape = 's32[1]{0}', space=sflag, size = 0x4, scoped, tag = 'scoped memory for tpu_custom_call.1']
    #allocation7 [shape = 'u8[4096]{0}', space=vmem, size = 0x1000, scoped, tag = 'output window, operand 0, single buffered']
    %12 = vsyncpa [#allocation3], 0
    %13 = vsyncpa [#allocation6], 0
    %14 = vsyncpa [#allocation4], 0
    // Predicated region
    $region2: #{tpu_custom_call.1} parent=1 // pred_check
      _
    $region3: #{tpu_custom_call.1} parent=1 // pred_check_branch
      %16 = sbr.rel (0) target = $region5
    $region4: #{tpu_custom_call.1} parent=1 // pred_region
      _
    $region5: #{tpu_custom_call.1} parent=1 // pred_fallthru
      _
    // Predicated region
    $region6: #{tpu_custom_call.1} parent=1 // pred_check
      _
    $region7: #{tpu_custom_call.1} parent=1 // pred_check_branch
      %18 = sbr.rel (0) target = $region9
    $region8: #{tpu_custom_call.1} parent=1 // pred_region
      %s20 = ssub.s32 768, 768
      %21 = vsyncadd [#allocation3], %s20
      %s22 = sshll.u32 [#allocation2], 4
      %s23 = int_to_ptr.vmem [resolvable:$true] %s22
      %28 = dma.hbm_to_vmem [thread:$0]  %s1, 768, %s23, [#allocation3], 384, 384, 24
    $region9: #{tpu_custom_call.1} parent=1 // pred_fallthru
      _
    // Predicated region
    $region10: #{tpu_custom_call.1} parent=1 // pred_check
      _
    $region11: #{tpu_custom_call.1} parent=1 // pred_check_branch
      %30 = sbr.rel (0) target = $region13
    $region12: #{tpu_custom_call.1} parent=1 // pred_region
      %s32 = ssub.s32 48, 48
      %33 = vsyncadd [#allocation6], %s32
      %s35 = sshll.u32 [#allocation5], 4
      %s36 = int_to_ptr.vmem [resolvable:$true] %s35
      %38 = dma.hbm_to_vmem [thread:$0]  %s2, 48, %s36, [#allocation6]
    $region13: #{tpu_custom_call.1} parent=1 // pred_fallthru
      _
    // Predicated region
    $region14: #{tpu_custom_call.1} parent=1 // pred_check
      _
    $region15: #{tpu_custom_call.1} parent=1 // pred_check_branch
      %40 = sbr.rel (0) target = $region17
    $region16: #{tpu_custom_call.1} parent=1 // pred_region
      _
    $region17: #{tpu_custom_call.1} parent=1 // pred_fallthru
      _
    // Predicated region
    $region18: #{tpu_custom_call.1} parent=1 // pred_check
      _
    $region19: #{tpu_custom_call.1} parent=1 // pred_check_branch
      %42 = sbr.rel (0) target = $region21
    $region20: #{tpu_custom_call.1} parent=1 // pred_region
      _
    $region21: #{tpu_custom_call.1} parent=1 // pred_fallthru
      _
    // Predicated region
    $region22: #{tpu_custom_call.1} parent=1 // pred_check
      _
    $region23: #{tpu_custom_call.1} parent=1 // pred_check_branch
      %44 = sbr.rel (0) target = $region25
    $region24: #{tpu_custom_call.1} parent=1 // pred_region
      _
    $region25: #{tpu_custom_call.1} parent=1 // pred_fallthru
      _
    // Predicated region
    $region26: #{tpu_custom_call.1} parent=1 // pred_check
      _
    $region27: #{tpu_custom_call.1} parent=1 // pred_check_branch
      %46 = sbr.rel (0) target = $region29
    $region28: #{tpu_custom_call.1} parent=1 // pred_region
      _
    $region29: #{tpu_custom_call.1} parent=1 // pred_fallthru
      _
    // Predicated region
    $region30: #{tpu_custom_call.1} parent=1 // pred_check
      _
    $region31: #{tpu_custom_call.1} parent=1 // pred_check_branch
      %48 = sbr.rel (0) target = $region33
    $region32: #{tpu_custom_call.1} parent=1 // pred_region
      %49 = dma.done [#allocation3], 768
    $region33: #{tpu_custom_call.1} parent=1 // pred_fallthru
      _
    // Predicated region
    $region34: #{tpu_custom_call.1} parent=1 // pred_check
      _
    $region35: #{tpu_custom_call.1} parent=1 // pred_check_branch
      %51 = sbr.rel (0) target = $region37
    $region36: #{tpu_custom_call.1} parent=1 // pred_region
      %52 = dma.done [#allocation6], 48
    $region37: #{tpu_custom_call.1} parent=1 // pred_fallthru
      _
    %v53 = vld [vmem:[%s0] sm:$0xff]
    %v54 = vld [vmem:[#allocation2] sm:$0xff]
    %v55 = vld [vmem:[#allocation2 + $0x8] sm:$0xff]
    %v56 = vld [vmem:[#allocation2 + $0x10] sm:$0xff]
    %v57 = vld [vmem:[#allocation2 + $0x18] sm:$0x1f]
    %v58 = vld [vmem:[#allocation2 + $0x20] sm:$0x1f]
    %v59 = vld [vmem:[#allocation2 + $0x28] sm:$0x1f]
    %v60 = vld [vmem:[#allocation5] sm:$0x7]
    %v62 = vlaneseq
    %v63 = vshrl.u32 %v62, 7
    %v64 = vsub.s32 0, %v63
    %v65 = vrot.slane %v60, %v64
    %v66 = vlaneseq
    %v67 = vshrl.u32 %v66, 7
    %v68 = vsub.s32 1, %v67
    %v69 = vrot.slane %v60, %v68
    %v70 = vlaneseq
    %v71 = vshrl.u32 %v70, 7
    %v72 = vsub.s32 2, %v71
    %v73 = vrot.slane %v60, %v72
    %vm77 = vcmask 105472
    %v79 = vsel %vm77, %v53, 0
    %vm81 = vcmask 1044480
    %v83 = vsel %vm81, %v57, 0
    %v86 = vsel %vm81, %v58, 0
    %v89 = vsel %vm81, %v59, 0
    %91 = vmatprep.subr.mxu0 0.0
    %92 = vmatpush1.msra.mxu0 0.0
    %93 = vmatprep.subr.mxu0 0.0
    %94 = vmatpush1.msra.mxu0 0.0
    %95 = vmatprep.subr.mxu0 0.0
    %96 = vmatpush1.msra.mxu0 0.0
    %97 = vmatprep.subr.mxu0 0.0
    %98 = vmatpush1.msra.mxu0 0.0
    %99 = vmatprep.subr.mxu0 0.0
    %100 = vmatpush1.msra.mxu0 0.0
    %101 = vmatprep.subr.mxu0 0.0
    %102 = vmatpush1.msra.mxu0 0.0
    %103 = vmatprep.subr.mxu0 0.0
    %104 = vmatpush1.msra.mxu0 0.0
    %105 = vmatprep.subr.mxu0 0.0
    %106 = vmatpush1.msra.mxu0 0.0
    %107 = vmatprep.subr.mxu0 0.0
    %108 = vmatpush1.msra.mxu0 0.0
    %109 = vmatprep.subr.mxu0 0.0
    %110 = vmatpush1.msra.mxu0 0.0
    %111 = vmatprep.subr.mxu0 0.0
    %112 = vmatpush1.msra.mxu0 0.0
    %113 = vmatprep.subr.mxu0 0.0
    %114 = vmatpush1.msra.mxu0 0.0
    %115 = vmatprep.subr.mxu0 0.0
    %116 = vmatpush1.msra.mxu0 0.0
    %117 = vmatprep.subr.mxu0 0.0
    %118 = vmatpush1.msra.mxu0 0.0
    %119 = vmatprep.subr.mxu0 %v86
    %120 = vmatpush1.msra.mxu0 %v83
    %121 = vmatprep.subr.mxu0 %v55
    %122 = vmatpush1.msra.mxu0 %v54
    %123 = vmatprep.subr.mxu0 0.0
    %124 = vmatpush2.msra.mxu0 0.0
    %125 = vmatprep.subr.mxu0 0.0
    %126 = vmatpush2.msra.mxu0 0.0
    %127 = vmatprep.subr.mxu0 0.0
    %128 = vmatpush2.msra.mxu0 0.0
    %129 = vmatprep.subr.mxu0 0.0
    %130 = vmatpush2.msra.mxu0 0.0
    %131 = vmatprep.subr.mxu0 0.0
    %132 = vmatpush2.msra.mxu0 0.0
    %133 = vmatprep.subr.mxu0 0.0
    %134 = vmatpush2.msra.mxu0 0.0
    %135 = vmatprep.subr.mxu0 0.0
    %136 = vmatpush2.msra.mxu0 0.0
    %137 = vmatprep.subr.mxu0 0.0
    %138 = vmatpush2.msra.mxu0 0.0
    %139 = vmatprep.subr.mxu0 0.0
    %140 = vmatpush2.msra.mxu0 0.0
    %141 = vmatprep.subr.mxu0 0.0
    %142 = vmatpush2.msra.mxu0 0.0
    %143 = vmatprep.subr.mxu0 0.0
    %144 = vmatpush2.msra.mxu0 0.0
    %145 = vmatprep.subr.mxu0 0.0
    %146 = vmatpush2.msra.mxu0 0.0
    %147 = vmatprep.subr.mxu0 0.0
    %148 = vmatpush2.msra.mxu0 0.0
    %149 = vmatprep.subr.mxu0 0.0
    %150 = vmatpush2.msra.mxu0 0.0
    %151 = vmatprep.subr.mxu0 0.0
    %152 = vmatpush2.msra.mxu0 0.0
    %153 = vmatprep.subr.mxu0 0.0
    %154 = vmatpush2.msra.mxu0 0.0
    %155 = vmatprep.mubr.f32.mxu0 0.0
    %156 = vmatmul.mubr.f32.gmra.mxu0 %v79
    %v157 = vpop.f32.mrf.mxu0
    %v158 = vadd.f32 %v65, %v157
    %v159 = vpop.f32.mrf.mxu0
    %v160 = vadd.f32 %v69, %v159
    %161 = vdwg.mxu0
    %162 = vmatprep.subr.mxu0 0.0
    %163 = vmatpush1.msra.mxu0 0.0
    %164 = vmatprep.subr.mxu0 0.0
    %165 = vmatpush1.msra.mxu0 0.0
    %166 = vmatprep.subr.mxu0 0.0
    %167 = vmatpush1.msra.mxu0 0.0
    %168 = vmatprep.subr.mxu0 0.0
    %169 = vmatpush1.msra.mxu0 0.0
    %170 = vmatprep.subr.mxu0 0.0
    %171 = vmatpush1.msra.mxu0 0.0
    %172 = vmatprep.subr.mxu0 0.0
    %173 = vmatpush1.msra.mxu0 0.0
    %174 = vmatprep.subr.mxu0 0.0
    %175 = vmatpush1.msra.mxu0 0.0
    %176 = vmatprep.subr.mxu0 0.0
    %177 = vmatpush1.msra.mxu0 0.0
    %178 = vmatprep.subr.mxu0 0.0
    %179 = vmatpush1.msra.mxu0 0.0
    %180 = vmatprep.subr.mxu0 0.0
    %181 = vmatpush1.msra.mxu0 0.0
    %182 = vmatprep.subr.mxu0 0.0
    %183 = vmatpush1.msra.mxu0 0.0
    %184 = vmatprep.subr.mxu0 0.0
    %185 = vmatpush1.msra.mxu0 0.0
    %186 = vmatprep.subr.mxu0 0.0
    %187 = vmatpush1.msra.mxu0 0.0
    %188 = vmatprep.subr.mxu0 0.0
    %189 = vmatpush1.msra.mxu0 0.0
    %190 = vmatprep.subr.mxu0 0.0
    %191 = vmatpush1.msra.mxu0 %v89
    %192 = vmatprep.subr.mxu0 0.0
    %193 = vmatpush1.msra.mxu0 %v56
    %194 = vmatprep.subr.mxu0 0.0
    %195 = vmatpush2.msra.mxu0 0.0
    %196 = vmatprep.subr.mxu0 0.0
    %197 = vmatpush2.msra.mxu0 0.0
    %198 = vmatprep.subr.mxu0 0.0
    %199 = vmatpush2.msra.mxu0 0.0
    %200 = vmatprep.subr.mxu0 0.0
    %201 = vmatpush2.msra.mxu0 0.0
    %202 = vmatprep.subr.mxu0 0.0
    %203 = vmatpush2.msra.mxu0 0.0
    %204 = vmatprep.subr.mxu0 0.0
    %205 = vmatpush2.msra.mxu0 0.0
    %206 = vmatprep.subr.mxu0 0.0
    %207 = vmatpush2.msra.mxu0 0.0
    %208 = vmatprep.subr.mxu0 0.0
    %209 = vmatpush2.msra.mxu0 0.0
    %210 = vmatprep.subr.mxu0 0.0
    %211 = vmatpush2.msra.mxu0 0.0
    %212 = vmatprep.subr.mxu0 0.0
    %213 = vmatpush2.msra.mxu0 0.0
    %214 = vmatprep.subr.mxu0 0.0
    %215 = vmatpush2.msra.mxu0 0.0
    %216 = vmatprep.subr.mxu0 0.0
    %217 = vmatpush2.msra.mxu0 0.0
    %218 = vmatprep.subr.mxu0 0.0
    %219 = vmatpush2.msra.mxu0 0.0
    %220 = vmatprep.subr.mxu0 0.0
    %221 = vmatpush2.msra.mxu0 0.0
    %222 = vmatprep.subr.mxu0 0.0
    %223 = vmatpush2.msra.mxu0 0.0
    %224 = vmatprep.subr.mxu0 0.0
    %225 = vmatpush2.msra.mxu0 0.0
    %226 = vmatprep.mubr.f32.mxu0 0.0
    %227 = vmatmul.mubr.f32.gmra.mxu0 %v79
    %v228 = vpop.f32.mrf.mxu0
    %v229 = vadd.f32 %v73, %v228
    %v230 = vpop.f32.mrf.mxu0
    %231 = vdwg.mxu0
    %v232 = vxor.u32 %v158, 2147483648
    %v233 = vmul.f32 %v232, 1.442695
    %v234 = vpow.pop %v233
    %v235 = vadd.f32 %v234, 1.0
    %v236 = vrcp.pop %v235
    %v237 = vmul.f32 1.0, %v236
    %v238 = vtanh.pop %v160
    %v239 = vxor.u32 %v229, 2147483648
    %v240 = vmul.f32 %v239, 1.442695
    %v241 = vpow.pop %v240
    %v242 = vadd.f32 %v241, 1.0
    %v243 = vrcp.pop %v242
    %v244 = vmul.f32 1.0, %v243
    %v245 = vmul.f32 %v237, %v238
    %v246 = vtanh.pop %v245
    %v247 = vmul.f32 %v244, %v246
    %v248 = vld [vmem:[%s3] sm:$0xff]
    %v249 = vld [vmem:[%s3 + $0x8] sm:$0xff]
    %v250 = vld [vmem:[%s3 + $0x10] sm:$0xff]
    %v251 = vld [vmem:[%s3 + $0x18] sm:$0xff]
    %v252 = vld [vmem:[%s3 + $0x20] sm:$0xff]
    %v253 = vld [vmem:[%s3 + $0x28] sm:$0xff]
    %v254 = vld [vmem:[%s3 + $0x30] sm:$0xff]
    %v255 = vld [vmem:[%s3 + $0x38] sm:$0xff]
    %v256 = vld [vmem:[%s3 + $0x40] sm:$0xff]
    %v257 = vld [vmem:[%s3 + $0x48] sm:$0xff]
    %v258 = vld [vmem:[%s3 + $0x50] sm:$0xff]
    %v259 = vld [vmem:[%s3 + $0x58] sm:$0xff]
    %v260 = vld [vmem:[%s3 + $0x60] sm:$0xff]
    %v261 = vld [vmem:[%s3 + $0x68] sm:$0xff]
    %v262 = vld [vmem:[%s3 + $0x70] sm:$0xff]
    %v263 = vld [vmem:[%s3 + $0x78] sm:$0xff]
    %v264 = vld [vmem:[%s4] sm:$0x1]
    %v266 = vlaneseq
    %v267 = vshrl.u32 %v266, 7
    %v268 = vsub.s32 0, %v267
    %v269 = vrot.slane %v264, %v268
    %271 = vmatprep.subr.mxu0 0.0
    %272 = vmatpush1.msra.mxu0 %v263
    %273 = vmatprep.subr.mxu0 0.0
    %274 = vmatpush1.msra.mxu0 %v262
    %275 = vmatprep.subr.mxu0 0.0
    %276 = vmatpush1.msra.mxu0 %v261
    %277 = vmatprep.subr.mxu0 0.0
    %278 = vmatpush1.msra.mxu0 %v260
    %279 = vmatprep.subr.mxu0 0.0
    %280 = vmatpush1.msra.mxu0 %v259
    %281 = vmatprep.subr.mxu0 0.0
    %282 = vmatpush1.msra.mxu0 %v258
    %283 = vmatprep.subr.mxu0 0.0
    %284 = vmatpush1.msra.mxu0 %v257
    %285 = vmatprep.subr.mxu0 0.0
    %286 = vmatpush1.msra.mxu0 %v256
    %287 = vmatprep.subr.mxu0 0.0
    %288 = vmatpush1.msra.mxu0 %v255
    %289 = vmatprep.subr.mxu0 0.0
    %290 = vmatpush1.msra.mxu0 %v254
    %291 = vmatprep.subr.mxu0 0.0
    %292 = vmatpush1.msra.mxu0 %v253
    %293 = vmatprep.subr.mxu0 0.0
    %294 = vmatpush1.msra.mxu0 %v252
    %295 = vmatprep.subr.mxu0 0.0
    %296 = vmatpush1.msra.mxu0 %v251
    %297 = vmatprep.subr.mxu0 0.0
    %298 = vmatpush1.msra.mxu0 %v250
    %299 = vmatprep.subr.mxu0 0.0
    %300 = vmatpush1.msra.mxu0 %v249
    %301 = vmatprep.subr.mxu0 0.0
    %302 = vmatpush1.msra.mxu0 %v248
    %303 = vmatprep.subr.mxu0 0.0
    %304 = vmatpush2.msra.mxu0 0.0
    %305 = vmatprep.subr.mxu0 0.0
    %306 = vmatpush2.msra.mxu0 0.0
    %307 = vmatprep.subr.mxu0 0.0
    %308 = vmatpush2.msra.mxu0 0.0
    %309 = vmatprep.subr.mxu0 0.0
    %310 = vmatpush2.msra.mxu0 0.0
    %311 = vmatprep.subr.mxu0 0.0
    %312 = vmatpush2.msra.mxu0 0.0
    %313 = vmatprep.subr.mxu0 0.0
    %314 = vmatpush2.msra.mxu0 0.0
    %315 = vmatprep.subr.mxu0 0.0
    %316 = vmatpush2.msra.mxu0 0.0
    %317 = vmatprep.subr.mxu0 0.0
    %318 = vmatpush2.msra.mxu0 0.0
    %319 = vmatprep.subr.mxu0 0.0
    %320 = vmatpush2.msra.mxu0 0.0
    %321 = vmatprep.subr.mxu0 0.0
    %322 = vmatpush2.msra.mxu0 0.0
    %323 = vmatprep.subr.mxu0 0.0
    %324 = vmatpush2.msra.mxu0 0.0
    %325 = vmatprep.subr.mxu0 0.0
    %326 = vmatpush2.msra.mxu0 0.0
    %327 = vmatprep.subr.mxu0 0.0
    %328 = vmatpush2.msra.mxu0 0.0
    %329 = vmatprep.subr.mxu0 0.0
    %330 = vmatpush2.msra.mxu0 0.0
    %331 = vmatprep.subr.mxu0 0.0
    %332 = vmatpush2.msra.mxu0 0.0
    %333 = vmatprep.subr.mxu0 0.0
    %334 = vmatpush2.msra.mxu0 0.0
    %335 = vmatprep.mubr.f32.mxu0 0.0
    %336 = vmatmul.mubr.f32.gmra.mxu0 %v247
    %v337 = vpop.f32.mrf.mxu0
    %v338 = vadd.f32 %v269, %v337
    %v339 = vpop.f32.mrf.mxu0
    %340 = vdwg.mxu0
    %v341 = vld [vmem:[%s5] sm:$0xff]
    %v342 = vld [vmem:[%s5 + $0x8] sm:$0xff]
    %v343 = vld [vmem:[%s5 + $0x10] sm:$0xff]
    %v344 = vld [vmem:[%s5 + $0x18] sm:$0xff]
    %v345 = vld [vmem:[%s5 + $0x20] sm:$0xff]
    %v346 = vld [vmem:[%s5 + $0x28] sm:$0xff]
    %v347 = vld [vmem:[%s5 + $0x30] sm:$0xff]
    %v348 = vld [vmem:[%s5 + $0x38] sm:$0xff]
    %v349 = vld [vmem:[%s5 + $0x40] sm:$0xff]
    %v350 = vld [vmem:[%s5 + $0x48] sm:$0xff]
    %v351 = vld [vmem:[%s5 + $0x50] sm:$0xff]
    %v352 = vld [vmem:[%s5 + $0x58] sm:$0xff]
    %v353 = vld [vmem:[%s5 + $0x60] sm:$0xff]
    %v354 = vld [vmem:[%s5 + $0x68] sm:$0xff]
    %v355 = vld [vmem:[%s5 + $0x70] sm:$0xff]
    %v356 = vld [vmem:[%s5 + $0x78] sm:$0xff]
    %v357 = vld [vmem:[%s6] sm:$0x1]
    %v359 = vlaneseq
    %v360 = vshrl.u32 %v359, 7
    %v361 = vsub.s32 0, %v360
    %v362 = vrot.slane %v357, %v361
    %364 = vmatprep.subr.mxu0 0.0
    %365 = vmatpush1.msra.mxu0 %v356
    %366 = vmatprep.subr.mxu0 0.0
    %367 = vmatpush1.msra.mxu0 %v355
    %368 = vmatprep.subr.mxu0 0.0
    %369 = vmatpush1.msra.mxu0 %v354
    %370 = vmatprep.subr.mxu0 0.0
    %371 = vmatpush1.msra.mxu0 %v353
    %372 = vmatprep.subr.mxu0 0.0
    %373 = vmatpush1.msra.mxu0 %v352
    %374 = vmatprep.subr.mxu0 0.0
    %375 = vmatpush1.msra.mxu0 %v351
    %376 = vmatprep.subr.mxu0 0.0
    %377 = vmatpush1.msra.mxu0 %v350
    %378 = vmatprep.subr.mxu0 0.0
    %379 = vmatpush1.msra.mxu0 %v349
    %380 = vmatprep.subr.mxu0 0.0
    %381 = vmatpush1.msra.mxu0 %v348
    %382 = vmatprep.subr.mxu0 0.0
    %383 = vmatpush1.msra.mxu0 %v347
    %384 = vmatprep.subr.mxu0 0.0
    %385 = vmatpush1.msra.mxu0 %v346
    %386 = vmatprep.subr.mxu0 0.0
    %387 = vmatpush1.msra.mxu0 %v345
    %388 = vmatprep.subr.mxu0 0.0
    %389 = vmatpush1.msra.mxu0 %v344
    %390 = vmatprep.subr.mxu0 0.0
    %391 = vmatpush1.msra.mxu0 %v343
    %392 = vmatprep.subr.mxu0 0.0
    %393 = vmatpush1.msra.mxu0 %v342
    %394 = vmatprep.subr.mxu0 0.0
    %395 = vmatpush1.msra.mxu0 %v341
    %396 = vmatprep.subr.mxu0 0.0
    %397 = vmatpush2.msra.mxu0 0.0
    %398 = vmatprep.subr.mxu0 0.0
    %399 = vmatpush2.msra.mxu0 0.0
    %400 = vmatprep.subr.mxu0 0.0
    %401 = vmatpush2.msra.mxu0 0.0
    %402 = vmatprep.subr.mxu0 0.0
    %403 = vmatpush2.msra.mxu0 0.0
    %404 = vmatprep.subr.mxu0 0.0
    %405 = vmatpush2.msra.mxu0 0.0
    %406 = vmatprep.subr.mxu0 0.0
    %407 = vmatpush2.msra.mxu0 0.0
    %408 = vmatprep.subr.mxu0 0.0
    %409 = vmatpush2.msra.mxu0 0.0
    %410 = vmatprep.subr.mxu0 0.0
    %411 = vmatpush2.msra.mxu0 0.0
    %412 = vmatprep.subr.mxu0 0.0
    %413 = vmatpush2.msra.mxu0 0.0
    %414 = vmatprep.subr.mxu0 0.0
    %415 = vmatpush2.msra.mxu0 0.0
    %416 = vmatprep.subr.mxu0 0.0
    %417 = vmatpush2.msra.mxu0 0.0
    %418 = vmatprep.subr.mxu0 0.0
    %419 = vmatpush2.msra.mxu0 0.0
    %420 = vmatprep.subr.mxu0 0.0
    %421 = vmatpush2.msra.mxu0 0.0
    %422 = vmatprep.subr.mxu0 0.0
    %423 = vmatpush2.msra.mxu0 0.0
    %424 = vmatprep.subr.mxu0 0.0
    %425 = vmatpush2.msra.mxu0 0.0
    %426 = vmatprep.subr.mxu0 0.0
    %427 = vmatpush2.msra.mxu0 0.0
    %428 = vmatprep.mubr.f32.mxu0 0.0
    %429 = vmatmul.mubr.f32.gmra.mxu0 %v338
    %v430 = vpop.f32.mrf.mxu0
    %v431 = vadd.f32 %v362, %v430
    %v432 = vpop.f32.mrf.mxu0
    %433 = vdwg.mxu0
    %vm434 = vcmask 64512
    %v435 = vsel %vm434, %v431, -inf
    %436 = vmax.xlane.f32.xlu0 %v435
    %v437 = vpop.xlane.xlu0 %436
    %v438 = vsub.f32 %v431, %v437
    %v439 = vmul.f32 %v438, 1.442695
    %v440 = vpow.pop %v439
    %v441 = vsel %vm434, %v440, 0.0
    %442 = vadd.xlane.f32.xlu0 %v441
    %v443 = vpop.xlane.xlu0 %442
    %v444 = vrcp.pop %v443
    %v445 = vmul.f32 %v440, %v444
    %446 = vst.msk [vmem:[#allocation7] sm:$0xff] %vm434, %v445
    // Predicated region
    $region38: #{tpu_custom_call.1} parent=1 // pred_check
      _
    $region39: #{tpu_custom_call.1} parent=1 // pred_check_branch
      %448 = sbr.rel (0) target = $region41
    $region40: #{tpu_custom_call.1} parent=1 // pred_region
      %s450 = ssub.s32 128, 128
      %451 = vsyncadd [#allocation4], %s450
      %s453 = sshll.u32 [#allocation7], 4
      %s454 = int_to_ptr.vmem [resolvable:$true] %s453
      %456 = dma.vmem_to_hbm [thread:$0]  %s454, 128, %s7, [#allocation4]
    $region41: #{tpu_custom_call.1} parent=1 // pred_fallthru
      _
    // Predicated region
    $region42: #{tpu_custom_call.1} parent=1 // pred_check
      _
    $region43: #{tpu_custom_call.1} parent=1 // pred_check_branch
      %458 = sbr.rel (0) target = $region45
    $region44: #{tpu_custom_call.1} parent=1 // pred_region
      %459 = dma.done [#allocation4], 128
    $region45: #{tpu_custom_call.1} parent=1 // pred_fallthru
      _
    %460 = vsyncpa [#allocation3], 1
    %461 = vsyncpa [#allocation6], 1
    %462 = vsyncpa [#allocation4], 1

</llo_original>
